<compile_context>
chip_gen: v5e
topology: v5e:2x2
jax: 0.10.0
libtpu: 0.0.40
codegen_flags: <defaults>
</compile_context>

<pallas_src>
import numpy as np

import jax
import jax.numpy as jnp
from jax import lax
from jax.experimental import pallas as pl
from jax.experimental.pallas import tpu as pltpu


def _round_up(x, m):
    return ((x + m - 1) // m) * m


# ----------------------------- Stage 1: batched input projection -----------------------------

def input_proj_kernel(x_ref, wf_ref, wb_ref, bf_ref, bb_ref, gf_ref, gb_ref):
    """One (bB, tT) tile: gates = x @ W_ih + b for both directions.

    Reads the natural [B, T, H] layout and writes time-major (T, B, 4H) bf16 gate streams;
    the transpose is done on the narrow f32 input inside the kernel so no separate XLA
    transpose/cast pass over HBM is needed.
    """
    bB, tT, H = x_ref.shape
    x = jnp.transpose(x_ref[...], (1, 0, 2)).reshape(tT * bB, H).astype(jnp.bfloat16)
    # Two separate per-direction dots: no (rows, 8H) f32 temp and no extra copy pass.
    gf = jnp.dot(x, wf_ref[...], preferred_element_type=jnp.float32) + bf_ref[...]
    gb = jnp.dot(x, wb_ref[...], preferred_element_type=jnp.float32) + bb_ref[...]
    gf_ref[...] = gf.reshape(tT, bB, 4 * H).astype(jnp.bfloat16)
    gb_ref[...] = gb.reshape(tT, bB, 4 * H).astype(jnp.bfloat16)


# ----------------------------- Stage 2: streamed bidirectional recurrence ---------------------

def recurrence_kernel(lens_ref, gf_ref, gb_ref, whf_ref, whb_ref,
                      outf_ref, outb_ref, hid_ref, state_ref):
    """One T-chunk of the interleaved forward / backward LSTM recurrence.

    The grid streams gf/outf in ascending T-chunks and gb/outb in descending T-chunks
    (see the BlockSpec index maps); (h, c) of both directions persist across chunks in
    VMEM scratch and are fori_loop carries (vregs) inside the chunk.
    """
    tT, Bp, H4 = gf_ref.shape
    H = H4 // 4
    i = pl.program_id(0)
    Tp = pl.num_programs(0) * tT

    @pl.when(i == 0)
    def _init():
        state_ref[...] = jnp.zeros_like(state_ref)

    lens = lens_ref[...]                      # (Bp, 1) int32, loaded once per chunk
    whf = whf_ref[...]                        # (H, 4H) bf16, fetched once (constant block)
    whb = whb_ref[...]

    def cell(pre, c):                         # gate/state math in f32 (v5e has no bf16 VPU/EUP)
        ig = jax.nn.sigmoid(pre[:, 0 * H:1 * H])
        fg = jax.nn.sigmoid(pre[:, 1 * H:2 * H])
        gg = jnp.tanh(pre[:, 2 * H:3 * H])
        og = jax.nn.sigmoid(pre[:, 3 * H:4 * H])
        c_new = fg * c + ig * gg
        return og * jnp.tanh(c_new), c_new

    t0 = i * tT

    def body(j, carry):
        h_f, c_f, h_b, c_b = carry
        t_f = t0 + j                          # forward global time (ascending)
        t_b = Tp - 1 - t_f                    # backward global time (descending)
        jb = tT - 1 - j                       # backward local row in this chunk

        # two independent h @ W_hh chains per iteration -> MXU/EUP latency overlap
        pre_f = gf_ref[j].astype(jnp.float32) + jnp.dot(
            h_f.astype(jnp.bfloat16), whf, preferred_element_type=jnp.float32)
        pre_b = gb_ref[jb].astype(jnp.float32) + jnp.dot(
            h_b.astype(jnp.bfloat16), whb, preferred_element_type=jnp.float32)
        hf_new, cf_new = cell(pre_f, c_f)
        hb_new, cb_new = cell(pre_b, c_b)

        mask_f = t_f < lens                   # (Bp, 1): packed-sequence validity
        mask_b = t_b < lens

        outf_ref[j] = jnp.where(mask_f, hf_new, 0.0)     # padded steps -> 0 (pad_packed)
        outb_ref[jb] = jnp.where(mask_b, hb_new, 0.0)

        h_f = jnp.where(mask_f, hf_new, h_f)
        c_f = jnp.where(mask_f, cf_new, c_f)
        h_b = jnp.where(mask_b, hb_new, h_b)
        c_b = jnp.where(mask_b, cb_new, c_b)
        return (h_f, c_f, h_b, c_b)

    carry0 = (state_ref[0], state_ref[1], state_ref[2], state_ref[3])
    h_f, c_f, h_b, c_b = lax.fori_loop(0, tT, body, carry0)

    state_ref[0] = h_f
    state_ref[1] = c_f
    state_ref[2] = h_b
    state_ref[3] = c_b
    hid_ref[...] = h_f + h_b                  # final chunk leaves hidden = h_f_last + h_b_last


# -------------------------------------- tiling / VMEM plan ------------------------------------

def _plan_tiles(B, T, H):
    """Choose padded sizes and tile sizes from an explicit VMEM budget (lane-padded bytes)."""
    lH = _round_up(H, 128)
    l4H = _round_up(4 * H, 128)
    Bp = _round_up(B, 8)
    budget = 20 << 20

    # Stage-2 streaming chunk over T: double-buffered bf16 gate chunks + f32 output chunks
    # for both directions, plus resident W_hh (counted x2 to be conservative) and state.
    per_t = Bp * (2 * 2 * l4H * 2 + 2 * 2 * lH * 4)
    fixed2 = 2 * (2 * H * l4H * 2) + 6 * Bp * lH * 4 + 2 * Bp * 128 * 4
    tT = max(8, min(128, ((budget - fixed2) // max(per_t, 1)) // 8 * 8))
    tT = min(tT, _round_up(T, 8))
    Tp = _round_up(T, tT)
    est2 = fixed2 + per_t * tT

    # Stage-1 batch tile: largest multiple-of-8 tile (<= 64) that divides Bp and fits.
    def est1(c):
        return (2 * c * tT * lH * 4            # x blocks (f32), double buffered
                + 2 * 2 * c * tT * l4H * 2     # gf+gb blocks (bf16), double buffered
                + 2 * (2 * H * l4H * 2)        # W_ih fwd+bwd, worst-case x2 buffers
                + 4 * 2 * l4H * 4)             # biases
    bB1 = 8
    for c in (64, 32, 16):
        if Bp % c == 0 and est1(c) <= budget:
            bB1 = c
            break
    return Bp, Tp, tT, bB1, est1(bB1), est2


def _vmem_limit(estimate):
    # Never below the 32 MiB v6e/v7x scoped default, capped at 48 MiB (legal on v7x's 64 MiB).
    return int(min(48 << 20, max(32 << 20, 3 * estimate // 2)))


# ------------------------------------------ wrapper -------------------------------------------

def rnn_encoder_forward(embedded_bth, seq_lens, params):
    """embedded_bth: [B, T, H]; seq_lens: per-sequence lengths with max(seq_lens) == T.

    Returns (outputs [T, B, H], hidden [B, H]) matching RNNEncoder.forward ('lstm').
    """
    wih_f, wih_b, b_f, b_b, whh_f, whh_b = params
    x = jnp.asarray(embedded_bth, jnp.float32)
    B, T, H = x.shape
    H4 = 4 * H
    Bp, Tp, tT, bB1, est1, est2 = _plan_tiles(B, T, H)

    lens = jnp.zeros((Bp,), jnp.int32).at[:B].set(jnp.asarray(seq_lens, jnp.int32))
    lens = lens.reshape(Bp, 1)
    if (Bp, Tp) != (B, T):
        x = jnp.pad(x, ((0, Bp - B), (0, Tp - T), (0, 0)))   # padded rows fully masked later

    wfb = wih_f.astype(jnp.bfloat16)
    wbb = wih_b.astype(jnp.bfloat16)
    bf32 = b_f.astype(jnp.float32).reshape(1, H4)
    bb32 = b_b.astype(jnp.float32).reshape(1, H4)

    # ---- stage 1: x @ W_ih + b for both directions; fully parallel tiled GEMM ----
    const2 = lambda b, t: (0, 0)
    proj_cost = pl.CostEstimate(
        flops=2 * Bp * Tp * H * 2 * H4,
        transcendentals=0,
        bytes_accessed=Bp * Tp * H * 4 + 2 * H * H4 * 2 + 2 * Tp * Bp * H4 * 2)

    gf, gb = pl.pallas_call(
        input_proj_kernel,
        out_shape=(jax.ShapeDtypeStruct((Tp, Bp, H4), jnp.bfloat16),
                   jax.ShapeDtypeStruct((Tp, Bp, H4), jnp.bfloat16)),
        grid=(Bp // bB1, Tp // tT),
        in_specs=[pl.BlockSpec((bB1, tT, H), lambda b, t: (b, t, 0)),
                  pl.BlockSpec((H, H4), const2),       # W_ih fwd (constant block -> fetched once)
                  pl.BlockSpec((H, H4), const2),       # W_ih bwd
                  pl.BlockSpec((1, H4), const2),       # bias fwd (b_ih + b_hh)
                  pl.BlockSpec((1, H4), const2)],      # bias bwd
        out_specs=(pl.BlockSpec((tT, bB1, H4), lambda b, t: (t, b, 0)),
                   pl.BlockSpec((tT, bB1, H4), lambda b, t: (t, b, 0))),
        compiler_params=pltpu.CompilerParams(
            dimension_semantics=("parallel", "parallel"),
            vmem_limit_bytes=_vmem_limit(est1)),
        cost_estimate=proj_cost,
    )(x, wfb, wbb, bf32, bb32)

    # ---- stage 2: recurrence streamed over T-chunks (only h @ W_hh per step) ----
    n_chunks = Tp // tT
    rec_cost = pl.CostEstimate(
        flops=Tp * (2 * 2 * Bp * H * H4 + 2 * 16 * Bp * H),
        transcendentals=Tp * 2 * 5 * Bp * H,
        bytes_accessed=2 * Tp * Bp * H4 * 2 + 2 * Tp * Bp * H * 4 + 2 * H * H4 * 2)

    out_f, out_b, hid = pl.pallas_call(
        recurrence_kernel,
        out_shape=(jax.ShapeDtypeStruct((Tp, Bp, H), jnp.float32),
                   jax.ShapeDtypeStruct((Tp, Bp, H), jnp.float32),
                   jax.ShapeDtypeStruct((Bp, H), jnp.float32)),
        grid=(n_chunks,),
        in_specs=[pl.BlockSpec((Bp, 1), lambda i: (0, 0)),                     # seq lens
                  pl.BlockSpec((tT, Bp, H4), lambda i: (i, 0, 0)),             # fwd gates (asc)
                  pl.BlockSpec((tT, Bp, H4), lambda i: (n_chunks - 1 - i, 0, 0)),  # bwd gates (desc)
                  pl.BlockSpec((H, H4), lambda i: (0, 0)),                     # W_hh fwd (resident)
                  pl.BlockSpec((H, H4), lambda i: (0, 0))],                    # W_hh bwd (resident)
        out_specs=(pl.BlockSpec((tT, Bp, H), lambda i: (i, 0, 0)),
                   pl.BlockSpec((tT, Bp, H), lambda i: (n_chunks - 1 - i, 0, 0)),
                   pl.BlockSpec((Bp, H), lambda i: (0, 0))),
        scratch_shapes=[pltpu.VMEM((4, Bp, H), jnp.float32)],                  # h/c of both dirs
        compiler_params=pltpu.CompilerParams(
            dimension_semantics=("arbitrary",),
            vmem_limit_bytes=_vmem_limit(est2)),
        cost_estimate=rec_cost,
    )(lens, gf, gb, whh_f.astype(jnp.bfloat16), whh_b.astype(jnp.bfloat16))

    # TODO(synk): on v7x, shard the two directions across the 2 TensorCores (size-2 "parallel"
    # grid axis / pl.core_map); on 1-TC chips the interleaved recurrence above is preferable.
    # TODO(synk): for very large B*H, also tile the batch axis of stage 2 (the recurrence is
    # independent across batch rows) and pad H to a multiple of 128 for lane-dense gate slices.
    outputs = out_f[:T, :B, :] + out_b[:T, :B, :]   # cheap fused XLA epilogue add of directions
    hidden = hid[:B, :]
    return outputs, hidden


# --------------------------------------- params & checks --------------------------------------

def init_params(key, H):
    """PyTorch nn.LSTM-style uniform(-1/sqrt(H), 1/sqrt(H)) init, both directions.

    Returns (wih_f [H,4H], wih_b [H,4H], b_f [1,4H], b_b [1,4H], whh_f [H,4H], whh_b [H,4H]),
    f32, PyTorch gate order (i, f, g, o) along each 4H block; b_* = bias_ih + bias_hh.
    """
    k = 1.0 / np.sqrt(H)
    keys = jax.random.split(key, 8)

    def u(kk, shape):
        return jax.random.uniform(kk, shape, jnp.float32, -k, k)

    wih_f = u(keys[0], (4 * H, H)); whh_f = u(keys[1], (4 * H, H))
    b_f = u(keys[2], (4 * H,)) + u(keys[3], (4 * H,))
    wih_b = u(keys[4], (4 * H, H)); whh_b = u(keys[5], (4 * H, H))
    b_b = u(keys[6], (4 * H,)) + u(keys[7], (4 * H,))
    return (wih_f.T, wih_b.T, b_f.reshape(1, 4 * H), b_b.reshape(1, 4 * H),
            whh_f.T, whh_b.T)


def _bf16_round(a):
    return np.asarray(jnp.asarray(np.asarray(a, np.float32)).astype(jnp.bfloat16)
                      .astype(jnp.float32), np.float64)


def _numpy_reference(embedded_bth, seq_lens, params, H):
    """Mirrors the kernel math (bf16 matmul operands + bf16 gate storage) in float64."""
    wih_f, wih_b, b_f, b_b, whh_f, whh_b = params
    x = _bf16_round(np.transpose(np.asarray(embedded_bth), (1, 0, 2)))   # [T, B, H]
    wf = _bf16_round(wih_f); wb = _bf16_round(wih_b)
    whf = _bf16_round(whh_f); whb = _bf16_round(whh_b)
    bf = np.asarray(b_f, np.float64).reshape(-1)
    bb = np.asarray(b_b, np.float64).reshape(-1)
    lens = np.asarray(seq_lens)
    T, B, _ = x.shape

    def sig(z):
        return 1.0 / (1.0 + np.exp(-z))

    def cell(pre, c):
        i = sig(pre[:, :H]); f = sig(pre[:, H:2 * H])
        g = np.tanh(pre[:, 2 * H:3 * H]); o = sig(pre[:, 3 * H:])
        c2 = f * c + i * g
        return o * np.tanh(c2), c2

    rows = x.reshape(T * B, H)
    Gf = _bf16_round(rows @ wf + bf).reshape(T, B, 4 * H)    # gates stored as bf16
    Gb = _bf16_round(rows @ wb + bb).reshape(T, B, 4 * H)

    out = np.zeros((T, B, H))
    hf = np.zeros((B, H)); cf = np.zeros((B, H))
    for t in range(T):
        h2, c2 = cell(Gf[t] + _bf16_round(hf) @ whf, cf)
        m = (t < lens)[:, None]
        hf = np.where(m, h2, hf); cf = np.where(m, c2, cf)
        out[t] += np.where(m, h2, 0.0)
    hb = np.zeros((B, H)); cb = np.zeros((B, H))
    for t in range(T - 1, -1, -1):
        h2, c2 = cell(Gb[t] + _bf16_round(hb) @ whb, cb)
        m = (t < lens)[:, None]
        hb = np.where(m, h2, hb); cb = np.where(m, c2, cb)
        out[t] += np.where(m, h2, 0.0)
    return out.astype(np.float32), (hf + hb).astype(np.float32)


if __name__ == "__main__":
    B, T, H = 2, 8, 32
    key = jax.random.PRNGKey(0)
    k_x, k_p = jax.random.split(key)

    embedded = jax.random.normal(k_x, (B, T, H), jnp.float32)   # [B, T, H]
    seq_lens = [8, 5]                                           # max == T (pad_packed default)
    params = init_params(k_p, H)

    outputs, hidden = rnn_encoder_forward(embedded, seq_lens, params)
    jax.block_until_ready((outputs, hidden))

    # Correctness check vs. a float64 transcription of the same (bf16-rounded) math.
    # Tolerance 5e-3: bf16 rounding of the MXU f32-accumulated gates can flip a rounding
    # boundary relative to the f64 reference; real logic bugs show errors >> 1e-2.
    ref_out, ref_hid = _numpy_reference(embedded, seq_lens, params, H)
    np.testing.assert_allclose(np.asarray(outputs), ref_out, rtol=5e-3, atol=5e-3)
    np.testing.assert_allclose(np.asarray(hidden), ref_hid, rtol=5e-3, atol=5e-3)

    assert outputs.shape == (T, B, H) and hidden.shape == (B, H)
    print("KERNEL_OK")
</pallas_src>

<mosaic_0001>
module attributes {stable_mosaic.version = 11 : i64} {
  func.func @input_proj_kernel(%arg0: i32, %arg1: i32, %arg2: memref<8x8x32xf32, #tpu.memory_space<vmem>>, %arg3: memref<32x128xbf16, #tpu.memory_space<vmem>>, %arg4: memref<32x128xbf16, #tpu.memory_space<vmem>>, %arg5: memref<1x128xf32, #tpu.memory_space<vmem>>, %arg6: memref<1x128xf32, #tpu.memory_space<vmem>>, %arg7: memref<8x8x128xbf16, #tpu.memory_space<vmem>>, %arg8: memref<8x8x128xbf16, #tpu.memory_space<vmem>>) attributes {dimension_semantics = [#tpu.dimension_semantics<parallel>, #tpu.dimension_semantics<parallel>], iteration_bounds = array<i64: 1, 1>, scalar_prefetch = 0 : i64, scratch_operands = 0 : i64, tpu.core_type = #tpu.core_type<tc>, window_params = [{transform_indices = @transform_0, window_bounds = array<i64: 8, 8, 32>}, {pipeline_mode = #tpu.pipeline_mode<synchronous>, transform_indices = @transform_1, window_bounds = array<i64: 32, 128>}, {pipeline_mode = #tpu.pipeline_mode<synchronous>, transform_indices = @transform_2, window_bounds = array<i64: 32, 128>}, {pipeline_mode = #tpu.pipeline_mode<synchronous>, transform_indices = @transform_3, window_bounds = array<i64: 1, 128>}, {pipeline_mode = #tpu.pipeline_mode<synchronous>, transform_indices = @transform_4, window_bounds = array<i64: 1, 128>}, {transform_indices = @transform_5, window_bounds = array<i64: 8, 8, 128>}, {transform_indices = @transform_6, window_bounds = array<i64: 8, 8, 128>}]} {
    %c0 = arith.constant 0 : index
    %c0_0 = arith.constant 0 : index
    %c0_1 = arith.constant 0 : index
    %0 = vector.load %arg2[%c0, %c0_0, %c0_1] : memref<8x8x32xf32, #tpu.memory_space<vmem>>, vector<8x8x32xf32>
    %1 = tpu.transpose %0, [1, 0, 2] : vector<8x8x32xf32> -> vector<8x8x32xf32>
    %2 = vector.shape_cast %1 : vector<8x8x32xf32> to vector<64x32xf32>
    %3 = arith.truncf %2 : vector<64x32xf32> to vector<64x32xbf16>
    %c0_2 = arith.constant 0 : index
    %c0_3 = arith.constant 0 : index
    %4 = vector.load %arg3[%c0_2, %c0_3] : memref<32x128xbf16, #tpu.memory_space<vmem>>, vector<32x128xbf16>
    %cst = arith.constant dense<0.000000e+00> : vector<64x128xf32>
    %5 = tpu.matmul %3, %4, %cst {dimension_numbers = #tpu.dot_dimension_numbers<[1], [0], [0], [1], [0, 0, 1, 1], [], []>} : vector<64x32xbf16>, vector<32x128xbf16>, vector<64x128xf32> -> vector<64x128xf32>
    %c0_4 = arith.constant 0 : index
    %c0_5 = arith.constant 0 : index
    %6 = vector.load %arg5[%c0_4, %c0_5] : memref<1x128xf32, #tpu.memory_space<vmem>>, vector<1x128xf32>
    %7 = vector.broadcast %6 : vector<1x128xf32> to vector<64x128xf32>
    %8 = arith.addf %5, %7 : vector<64x128xf32>
    %c0_6 = arith.constant 0 : index
    %c0_7 = arith.constant 0 : index
    %9 = vector.load %arg4[%c0_6, %c0_7] : memref<32x128xbf16, #tpu.memory_space<vmem>>, vector<32x128xbf16>
    %cst_8 = arith.constant dense<0.000000e+00> : vector<64x128xf32>
    %10 = tpu.matmul %3, %9, %cst_8 {dimension_numbers = #tpu.dot_dimension_numbers<[1], [0], [0], [1], [0, 0, 1, 1], [], []>} : vector<64x32xbf16>, vector<32x128xbf16>, vector<64x128xf32> -> vector<64x128xf32>
    %c0_9 = arith.constant 0 : index
    %c0_10 = arith.constant 0 : index
    %11 = vector.load %arg6[%c0_9, %c0_10] : memref<1x128xf32, #tpu.memory_space<vmem>>, vector<1x128xf32>
    %12 = vector.broadcast %11 : vector<1x128xf32> to vector<64x128xf32>
    %13 = arith.addf %10, %12 : vector<64x128xf32>
    %14 = vector.shape_cast %8 : vector<64x128xf32> to vector<8x8x128xf32>
    %15 = arith.truncf %14 : vector<8x8x128xf32> to vector<8x8x128xbf16>
    %c0_11 = arith.constant 0 : index
    %c0_12 = arith.constant 0 : index
    %c0_13 = arith.constant 0 : index
    %16 = vector.load %arg7[%c0_11, %c0_12, %c0_13] : memref<8x8x128xbf16, #tpu.memory_space<vmem>>, vector<8x8x128xbf16>
    tpu.vector_store %arg7[%c0_11, %c0_12, %c0_13], %15 {strides = array<i32>} : memref<8x8x128xbf16, #tpu.memory_space<vmem>>, vector<8x8x128xbf16>,
    %17 = vector.shape_cast %13 : vector<64x128xf32> to vector<8x8x128xf32>
    %18 = arith.truncf %17 : vector<8x8x128xf32> to vector<8x8x128xbf16>
    %c0_14 = arith.constant 0 : index
    %c0_15 = arith.constant 0 : index
    %c0_16 = arith.constant 0 : index
    %19 = vector.load %arg8[%c0_14, %c0_15, %c0_16] : memref<8x8x128xbf16, #tpu.memory_space<vmem>>, vector<8x8x128xbf16>
    tpu.vector_store %arg8[%c0_14, %c0_15, %c0_16], %18 {strides = array<i32>} : memref<8x8x128xbf16, #tpu.memory_space<vmem>>, vector<8x8x128xbf16>,
    return
  }
  func.func @transform_0(%arg0: i32, %arg1: i32) -> (i32, i32, i32) {
    %c0_i32 = arith.constant 0 : i32
    %c0_i32_0 = arith.constant 0 : i32
    return %arg0, %arg1, %c0_i32 : i32, i32, i32
  }
  func.func @transform_1(%arg0: i32, %arg1: i32) -> (i32, i32) {
    %c0_i32 = arith.constant 0 : i32
    %c0_i32_0 = arith.constant 0 : i32
    %c0_i32_1 = arith.constant 0 : i32
    return %c0_i32, %c0_i32_0 : i32, i32
  }
  func.func @transform_2(%arg0: i32, %arg1: i32) -> (i32, i32) {
    %c0_i32 = arith.constant 0 : i32
    %c0_i32_0 = arith.constant 0 : i32
    %c0_i32_1 = arith.constant 0 : i32
    return %c0_i32, %c0_i32_0 : i32, i32
  }
  func.func @transform_3(%arg0: i32, %arg1: i32) -> (i32, i32) {
    %c0_i32 = arith.constant 0 : i32
    %c0_i32_0 = arith.constant 0 : i32
    %c0_i32_1 = arith.constant 0 : i32
    return %c0_i32, %c0_i32_0 : i32, i32
  }
  func.func @transform_4(%arg0: i32, %arg1: i32) -> (i32, i32) {
    %c0_i32 = arith.constant 0 : i32
    %c0_i32_0 = arith.constant 0 : i32
    %c0_i32_1 = arith.constant 0 : i32
    return %c0_i32, %c0_i32_0 : i32, i32
  }
  func.func @transform_5(%arg0: i32, %arg1: i32) -> (i32, i32, i32) {
    %c0_i32 = arith.constant 0 : i32
    %c0_i32_0 = arith.constant 0 : i32
    return %arg1, %arg0, %c0_i32 : i32, i32, i32
  }
  func.func @transform_6(%arg0: i32, %arg1: i32) -> (i32, i32, i32) {
    %c0_i32 = arith.constant 0 : i32
    %c0_i32_0 = arith.constant 0 : i32
    return %arg1, %arg0, %c0_i32 : i32, i32, i32
  }
}

</mosaic_0001>

<llo_original>
// kernel: tpu_custom_call.1
$region0: #{tpu_custom_call.1}
  #allocation0 [shape = 'u32[]', space=smem, size = 0x4, offset = 0x4, fixed_abs, tag = 'smem constant byte address 0x4 - core index']
  #allocation1 [shape = 'u32[72,128]{1,0:T(1,128)}', space=vmem, size = 0x9000, scoped, tag = 'internal scratch']
  %s0 = inlined_call_operand.hbm [shape: f32[8,8,32], index: 0, kind: input, shape index: {}]
  %s1 = inlined_call_operand.hbm [shape: bf16[32,128], index: 1, kind: input, shape index: {}]
  %s2 = inlined_call_operand.hbm [shape: bf16[32,128], index: 2, kind: input, shape index: {}]
  %s3 = inlined_call_operand.vmem [shape: f32[1,128], index: 3, kind: input, shape index: {}]
  %s4 = inlined_call_operand.vmem [shape: f32[1,128], index: 4, kind: input, shape index: {}]
  %s5 = inlined_call_operand.hbm [shape: bf16[8,8,128], index: 5, kind: output, shape index: {0}]
  %s6 = inlined_call_operand.hbm [shape: bf16[8,8,128], index: 6, kind: output, shape index: {1}]
  %7 = xla_tuple %s5, %s6
  %s8 = sld [smem:[#allocation0]]
  $region50: #{tpu_custom_call.1} parent=0
    _
  %s10 = ssub.s32 1, %s8
  %s11 = scalar_select 0, %s10, %s8
  $region1: #{tpu_custom_call.1} parent=0
    #allocation2 [shape = 'u8[32768]{0}', space=vmem, size = 0x8000, scoped, tag = 'input window, operand 0, single buffered']
    #allocation3 [shape = 's32[1]{0}', space=sflag, size = 0x4, scoped, tag = 'scoped memory for tpu_custom_call.1']
    #allocation4 [shape = 's32[1]{0}', space=sflag, size = 0x4, scoped, tag = 'scoped memory for tpu_custom_call.1']
    #allocation5 [shape = 'u8[8192]{0}', space=vmem, size = 0x2000, scoped, tag = 'input window, operand 1, single buffered']
    #allocation6 [shape = 's32[1]{0}', space=sflag, size = 0x4, scoped, tag = 'scoped memory for tpu_custom_call.1']
    #allocation7 [shape = 'u8[8192]{0}', space=vmem, size = 0x2000, scoped, tag = 'input window, operand 2, single buffered']
    #allocation8 [shape = 'u8[16384]{0}', space=vmem, size = 0x4000, scoped, tag = 'output window, operand 0, single buffered']
    #allocation9 [shape = 'u8[16384]{0}', space=vmem, size = 0x4000, scoped, tag = 'output window, operand 1, single buffered']
    #allocation10 [shape = 's32[1]{0}', space=sflag, size = 0x4, scoped, tag = 'scoped memory for tpu_custom_call.1']
    %12 = vsyncpa [#allocation3], 0
    %13 = vsyncpa [#allocation6], 0
    %14 = vsyncpa [#allocation4], 0
    %15 = vsyncpa [#allocation10], 0
    // Predicated region
    $region2: #{tpu_custom_call.1} parent=1 // pred_check
      _
    $region3: #{tpu_custom_call.1} parent=1 // pred_check_branch
      %17 = sbr.rel (0) target = $region5
    $region4: #{tpu_custom_call.1} parent=1 // pred_region
      %19 = vsyncadd [#allocation3], 0
      %s20 = sshll.u32 %s0, 4
      %s21 = int_to_ptr.hbm [resolvable:$true] %s20
      %s22 = sshll.u32 [#allocation2], 4
      %s23 = int_to_ptr.vmem [resolvable:$true] %s22
      %28 = dma.hbm_to_vmem [thread:$0]  %s21, 1024, %s23, [#allocation3], 128, 128, 8
    $region5: #{tpu_custom_call.1} parent=1 // pred_fallthru
      _
    // Predicated region
    $region6: #{tpu_custom_call.1} parent=1 // pred_check
      _
    $region7: #{tpu_custom_call.1} parent=1 // pred_check_branch
      %30 = sbr.rel (0) target = $region9
    $region8: #{tpu_custom_call.1} parent=1 // pred_region
      %32 = vsyncadd [#allocation6], 0
      %s33 = sshll.u32 %s1, 4
      %s34 = int_to_ptr.hbm [resolvable:$true] %s33
      %s35 = sshll.u32 [#allocation5], 4
      %s36 = int_to_ptr.vmem [resolvable:$true] %s35
      %41 = dma.hbm_to_vmem [thread:$0]  %s34, 256, %s36, [#allocation6], 64, 64, 4
    $region9: #{tpu_custom_call.1} parent=1 // pred_fallthru
      _
    // Predicated region
    $region10: #{tpu_custom_call.1} parent=1 // pred_check
      _
    $region11: #{tpu_custom_call.1} parent=1 // pred_check_branch
      %43 = sbr.rel (0) target = $region13
    $region12: #{tpu_custom_call.1} parent=1 // pred_region
      %45 = vsyncadd [#allocation6], 0
      %s46 = sshll.u32 %s2, 4
      %s47 = int_to_ptr.hbm [resolvable:$true] %s46
      %s48 = sshll.u32 [#allocation7], 4
      %s49 = int_to_ptr.vmem [resolvable:$true] %s48
      %54 = dma.hbm_to_vmem [thread:$0]  %s47, 256, %s49, [#allocation6], 64, 64, 4
    $region13: #{tpu_custom_call.1} parent=1 // pred_fallthru
      _
    // Predicated region
    $region14: #{tpu_custom_call.1} parent=1 // pred_check
      _
    $region15: #{tpu_custom_call.1} parent=1 // pred_check_branch
      %56 = sbr.rel (0) target = $region17
    $region16: #{tpu_custom_call.1} parent=1 // pred_region
      _
    $region17: #{tpu_custom_call.1} parent=1 // pred_fallthru
      _
    // Predicated region
    $region18: #{tpu_custom_call.1} parent=1 // pred_check
      _
    $region19: #{tpu_custom_call.1} parent=1 // pred_check_branch
      %58 = sbr.rel (0) target = $region21
    $region20: #{tpu_custom_call.1} parent=1 // pred_region
      _
    $region21: #{tpu_custom_call.1} parent=1 // pred_fallthru
      _
    // Predicated region
    $region22: #{tpu_custom_call.1} parent=1 // pred_check
      _
    $region23: #{tpu_custom_call.1} parent=1 // pred_check_branch
      %60 = sbr.rel (0) target = $region25
    $region24: #{tpu_custom_call.1} parent=1 // pred_region
      %62 = dma.done [#allocation3], 1024
    $region25: #{tpu_custom_call.1} parent=1 // pred_fallthru
      _
    // Predicated region
    $region26: #{tpu_custom_call.1} parent=1 // pred_check
      _
    $region27: #{tpu_custom_call.1} parent=1 // pred_check_branch
      %64 = sbr.rel (0) target = $region29
    $region28: #{tpu_custom_call.1} parent=1 // pred_region
      %66 = dma.done [#allocation6], 256
    $region29: #{tpu_custom_call.1} parent=1 // pred_fallthru
      _
    // Predicated region
    $region30: #{tpu_custom_call.1} parent=1 // pred_check
      _
    $region31: #{tpu_custom_call.1} parent=1 // pred_check_branch
      %68 = sbr.rel (0) target = $region33
    $region32: #{tpu_custom_call.1} parent=1 // pred_region
      %70 = dma.done [#allocation6], 256
    $region33: #{tpu_custom_call.1} parent=1 // pred_fallthru
      _
    %v72 = vld [vmem:[#allocation2] sm:$0xff]
    %v73 = vld [vmem:[#allocation2 + $0x8] sm:$0xff]
    %v74 = vld [vmem:[#allocation2 + $0x10] sm:$0xff]
    %v75 = vld [vmem:[#allocation2 + $0x18] sm:$0xff]
    %v76 = vld [vmem:[#allocation2 + $0x20] sm:$0xff]
    %v77 = vld [vmem:[#allocation2 + $0x28] sm:$0xff]
    %v78 = vld [vmem:[#allocation2 + $0x30] sm:$0xff]
    %v79 = vld [vmem:[#allocation2 + $0x38] sm:$0xff]
    %v80 = vrot.slane %v74, 4
    %vm81 = vcmask 1047556
    %v82 = vsel %vm81, %v80, %v72
    %v83 = vrot.slane %v72, 4
    %v84 = vsel %vm81, %v74, %v83
    %v86 = vunpack.c.l.s4 1983009808
    %v87 = vunpack.c.0.s8 %v86
    %v88 = vperm.slane %v82, %v87
    %v90 = vunpack.c.l.s4 1983009808
    %v91 = vunpack.c.0.s8 %v90
    %v92 = vperm.slane %v84, %v91
    %v93 = vrot.slane %v75, 4
    %v94 = vsel %vm81, %v93, %v73
    %v95 = vrot.slane %v73, 4
    %v96 = vsel %vm81, %v75, %v95
    %v98 = vunpack.c.l.s4 1983009808
    %v99 = vunpack.c.0.s8 %v98
    %v100 = vperm.slane %v94, %v99
    %v102 = vunpack.c.l.s4 1983009808
    %v103 = vunpack.c.0.s8 %v102
    %v104 = vperm.slane %v96, %v103
    %v105 = vrot.slane %v78, 4
    %v106 = vsel %vm81, %v105, %v76
    %v107 = vrot.slane %v76, 4
    %v108 = vsel %vm81, %v78, %v107
    %v110 = vunpack.c.l.s4 1983009808
    %v111 = vunpack.c.0.s8 %v110
    %v112 = vperm.slane %v106, %v111
    %v114 = vunpack.c.l.s4 1983009808
    %v115 = vunpack.c.0.s8 %v114
    %v116 = vperm.slane %v108, %v115
    %v117 = vrot.slane %v79, 4
    %v118 = vsel %vm81, %v117, %v77
    %v119 = vrot.slane %v77, 4
    %v120 = vsel %vm81, %v79, %v119
    %v122 = vunpack.c.l.s4 1983009808
    %v123 = vunpack.c.0.s8 %v122
    %v124 = vperm.slane %v118, %v123
    %v126 = vunpack.c.l.s4 1983009808
    %v127 = vunpack.c.0.s8 %v126
    %v128 = vperm.slane %v120, %v127
    %v129 = vrot.slane %v100, 4
    %v130 = vsel %vm81, %v129, %v88
    %v131 = vrot.slane %v88, 4
    %v132 = vsel %vm81, %v100, %v131
    %v134 = vunpack.c.l.s4 1934713408
    %v135 = vunpack.c.0.s8 %v134
    %v136 = vperm.slane %v130, %v135
    %v138 = vunpack.c.l.s4 1934713408
    %v139 = vunpack.c.0.s8 %v138
    %v140 = vperm.slane %v132, %v139
    %v141 = vrot.slane %v104, 4
    %v142 = vsel %vm81, %v141, %v92
    %v143 = vrot.slane %v92, 4
    %v144 = vsel %vm81, %v104, %v143
    %v146 = vunpack.c.l.s4 1934713408
    %v147 = vunpack.c.0.s8 %v146
    %v148 = vperm.slane %v142, %v147
    %v150 = vunpack.c.l.s4 1934713408
    %v151 = vunpack.c.0.s8 %v150
    %v152 = vperm.slane %v144, %v151
    %v153 = vrot.slane %v124, 4
    %v154 = vsel %vm81, %v153, %v112
    %v155 = vrot.slane %v112, 4
    %v156 = vsel %vm81, %v124, %v155
    %v158 = vunpack.c.l.s4 1934713408
    %v159 = vunpack.c.0.s8 %v158
    %v160 = vperm.slane %v154, %v159
    %v162 = vunpack.c.l.s4 1934713408
    %v163 = vunpack.c.0.s8 %v162
    %v164 = vperm.slane %v156, %v163
    %v165 = vrot.slane %v128, 4
    %v166 = vsel %vm81, %v165, %v116
    %v167 = vrot.slane %v116, 4
    %v168 = vsel %vm81, %v128, %v167
    %v170 = vunpack.c.l.s4 1934713408
    %v171 = vunpack.c.0.s8 %v170
    %v172 = vperm.slane %v166, %v171
    %v174 = vunpack.c.l.s4 1934713408
    %v175 = vunpack.c.0.s8 %v174
    %v176 = vperm.slane %v168, %v175
    %v177 = vrot.slane %v160, 4
    %v178 = vsel %vm81, %v177, %v136
    %v179 = vrot.slane %v136, 4
    %v180 = vsel %vm81, %v160, %v179
    %v181 = vrot.slane %v164, 4
    %v182 = vsel %vm81, %v181, %v140
    %v183 = vrot.slane %v140, 4
    %v184 = vsel %vm81, %v164, %v183
    %v185 = vrot.slane %v172, 4
    %v186 = vsel %vm81, %v185, %v148
    %v187 = vrot.slane %v148, 4
    %v188 = vsel %vm81, %v172, %v187
    %v189 = vrot.slane %v176, 4
    %v190 = vsel %vm81, %v189, %v152
    %v191 = vrot.slane %v152, 4
    %v192 = vsel %vm81, %v176, %v191
    %v193 = vpack.c.bf16 %v180, %v178
    %v194 = vpack.c.bf16 %v184, %v182
    %v195 = vpack.c.bf16 %v188, %v186
    %v196 = vpack.c.bf16 %v192, %v190
    %v197 = vld [vmem:[#allocation5] sm:$0xf]
    %v198 = vld [vmem:[#allocation5 + $0x4] sm:$0xf]
    %v199 = vld [vmem:[#allocation5 + $0x8] sm:$0xf]
    %v200 = vld [vmem:[#allocation5 + $0xc] sm:$0xf]
    %v201 = vld [vmem:[%s3] sm:$0x1]
    %v203 = vperm.slane %v201, 0
    %v209 = vunpack.c.l.b16 %v197
    %v210 = vunpack.c.l.b16 %v198
    %v211 = vunpack.c.l.b16 %v199
    %v212 = vunpack.c.l.b16 %v200
    %v213 = vpack.c.b16 %v210, %v209
    %v214 = vpack.c.b16 %v212, %v211
    %vm217 = vcmask 261120
    %v219 = vsel %vm217, %v193, 0
    %v222 = vsel %vm217, %v194, 0
    %v225 = vsel %vm217, %v195, 0
    %v228 = vsel %vm217, %v196, 0
    %230 = vmatpush.bf16.msra.mxu0 0
    %231 = vmatpush.bf16.msra.mxu0 0
    %232 = vmatpush.bf16.msra.mxu0 0
    %233 = vmatpush.bf16.msra.mxu0 0
    %234 = vmatpush.bf16.msra.mxu0 0
    %235 = vmatpush.bf16.msra.mxu0 0
    %236 = vmatpush.bf16.msra.mxu0 %v214
    %237 = vmatpush.bf16.msra.mxu0 %v213
    %238 = vmatmul.bf16.gmra.mxu0 %v219
    %v239 = vpop.f32.mrf.mxu0
    %v240 = vadd.f32 %v203, %v239
    %v241 = vpop.f32.mrf.mxu0
    %v242 = vadd.f32 %v203, %v241
    %243 = vmatmul.bf16.gmra.mxu0 %v222
    %v244 = vpop.f32.mrf.mxu0
    %v245 = vadd.f32 %v203, %v244
    %v246 = vpop.f32.mrf.mxu0
    %v247 = vadd.f32 %v203, %v246
    %248 = vmatmul.bf16.gmra.mxu0 %v225
    %v249 = vpop.f32.mrf.mxu0
    %v250 = vadd.f32 %v203, %v249
    %v251 = vpop.f32.mrf.mxu0
    %v252 = vadd.f32 %v203, %v251
    %253 = vmatmul.bf16.gmra.mxu0 %v228
    %v254 = vpop.f32.mrf.mxu0
    %v255 = vadd.f32 %v203, %v254
    %v256 = vpop.f32.mrf.mxu0
    %v257 = vadd.f32 %v203, %v256
    %258 = vdwg.mxu0
    %v259 = vld [vmem:[#allocation7] sm:$0xf]
    %v260 = vld [vmem:[#allocation7 + $0x4] sm:$0xf]
    %v261 = vld [vmem:[#allocation7 + $0x8] sm:$0xf]
    %v262 = vld [vmem:[#allocation7 + $0xc] sm:$0xf]
    %v263 = vld [vmem:[%s4] sm:$0x1]
    %v265 = vperm.slane %v263, 0
    %v271 = vunpack.c.l.b16 %v259
    %v272 = vunpack.c.l.b16 %v260
    %v273 = vunpack.c.l.b16 %v261
    %v274 = vunpack.c.l.b16 %v262
    %v275 = vpack.c.b16 %v272, %v271
    %v276 = vpack.c.b16 %v274, %v273
    %279 = vmatpush.bf16.msra.mxu0 0
    %280 = vmatpush.bf16.msra.mxu0 0
    %281 = vmatpush.bf16.msra.mxu0 0
    %282 = vmatpush.bf16.msra.mxu0 0
    %283 = vmatpush.bf16.msra.mxu0 0
    %284 = vmatpush.bf16.msra.mxu0 0
    %285 = vmatpush.bf16.msra.mxu0 %v276
    %286 = vmatpush.bf16.msra.mxu0 %v275
    %287 = vmatmul.bf16.gmra.mxu0 %v219
    %v288 = vpop.f32.mrf.mxu0
    %v289 = vadd.f32 %v265, %v288
    %v290 = vpop.f32.mrf.mxu0
    %v291 = vadd.f32 %v265, %v290
    %292 = vmatmul.bf16.gmra.mxu0 %v222
    %v293 = vpop.f32.mrf.mxu0
    %v294 = vadd.f32 %v265, %v293
    %v295 = vpop.f32.mrf.mxu0
    %v296 = vadd.f32 %v265, %v295
    %297 = vmatmul.bf16.gmra.mxu0 %v225
    %v298 = vpop.f32.mrf.mxu0
    %v299 = vadd.f32 %v265, %v298
    %v300 = vpop.f32.mrf.mxu0
    %v301 = vadd.f32 %v265, %v300
    %302 = vmatmul.bf16.gmra.mxu0 %v228
    %v303 = vpop.f32.mrf.mxu0
    %v304 = vadd.f32 %v265, %v303
    %v305 = vpop.f32.mrf.mxu0
    %v306 = vadd.f32 %v265, %v305
    %307 = vdwg.mxu0
    %v308 = vpack.c.bf16 %v240, %v240
    %v309 = vpack.c.bf16 %v242, %v242
    %v310 = vpack.c.bf16 %v245, %v245
    %v311 = vpack.c.bf16 %v247, %v247
    %v312 = vpack.c.bf16 %v250, %v250
    %v313 = vpack.c.bf16 %v252, %v252
    %v314 = vpack.c.bf16 %v255, %v255
    %v315 = vpack.c.bf16 %v257, %v257
    %316 = vst [vmem:[#allocation8] sm:$0xf] %v308
    %317 = vst [vmem:[#allocation8 + $0x4] sm:$0xf] %v309
    %318 = vst [vmem:[#allocation8 + $0x8] sm:$0xf] %v310
    %319 = vst [vmem:[#allocation8 + $0xc] sm:$0xf] %v311
    %320 = vst [vmem:[#allocation8 + $0x10] sm:$0xf] %v312
    %321 = vst [vmem:[#allocation8 + $0x14] sm:$0xf] %v313
    %322 = vst [vmem:[#allocation8 + $0x18] sm:$0xf] %v314
    %323 = vst [vmem:[#allocation8 + $0x1c] sm:$0xf] %v315
    %v324 = vpack.c.bf16 %v289, %v289
    %v325 = vpack.c.bf16 %v291, %v291
    %v326 = vpack.c.bf16 %v294, %v294
    %v327 = vpack.c.bf16 %v296, %v296
    %v328 = vpack.c.bf16 %v299, %v299
    %v329 = vpack.c.bf16 %v301, %v301
    %v330 = vpack.c.bf16 %v304, %v304
    %v331 = vpack.c.bf16 %v306, %v306
    %332 = vst [vmem:[#allocation9] sm:$0xf] %v324
    %333 = vst [vmem:[#allocation9 + $0x4] sm:$0xf] %v325
    %334 = vst [vmem:[#allocation9 + $0x8] sm:$0xf] %v326
    %335 = vst [vmem:[#allocation9 + $0xc] sm:$0xf] %v327
    %336 = vst [vmem:[#allocation9 + $0x10] sm:$0xf] %v328
    %337 = vst [vmem:[#allocation9 + $0x14] sm:$0xf] %v329
    %338 = vst [vmem:[#allocation9 + $0x18] sm:$0xf] %v330
    %339 = vst [vmem:[#allocation9 + $0x1c] sm:$0xf] %v331
    // Predicated region
    $region34: #{tpu_custom_call.1} parent=1 // pred_check
      _
    $region35: #{tpu_custom_call.1} parent=1 // pred_check_branch
      %341 = sbr.rel (0) target = $region37
    $region36: #{tpu_custom_call.1} parent=1 // pred_region
      %343 = vsyncadd [#allocation4], 0
      %s344 = sshll.u32 [#allocation8], 4
      %s345 = int_to_ptr.vmem [resolvable:$true] %s344
      %s346 = sshll.u32 %s5, 4
      %s347 = int_to_ptr.hbm [resolvable:$true] %s346
      %352 = dma.vmem_to_hbm [thread:$0]  %s345, 512, %s347, [#allocation4], 64, 64, 4
    $region37: #{tpu_custom_call.1} parent=1 // pred_fallthru
      _
    // Predicated region
    $region38: #{tpu_custom_call.1} parent=1 // pred_check
      _
    $region39: #{tpu_custom_call.1} parent=1 // pred_check_branch
      %354 = sbr.rel (0) target = $region41
    $region40: #{tpu_custom_call.1} parent=1 // pred_region
      %356 = vsyncadd [#allocation10], 0
      %s357 = sshll.u32 [#allocation9], 4
      %s358 = int_to_ptr.vmem [resolvable:$true] %s357
      %s359 = sshll.u32 %s6, 4
      %s360 = int_to_ptr.hbm [resolvable:$true] %s359
      %365 = dma.vmem_to_hbm [thread:$0]  %s358, 512, %s360, [#allocation10], 64, 64, 4
    $region41: #{tpu_custom_call.1} parent=1 // pred_fallthru
      _
    // Predicated region
    $region42: #{tpu_custom_call.1} parent=1 // pred_check
      _
    $region43: #{tpu_custom_call.1} parent=1 // pred_check_branch
      %367 = sbr.rel (0) target = $region45
    $region44: #{tpu_custom_call.1} parent=1 // pred_region
      %369 = dma.done [#allocation4], 512
    $region45: #{tpu_custom_call.1} parent=1 // pred_fallthru
      _
    // Predicated region
    $region46: #{tpu_custom_call.1} parent=1 // pred_check
      _
    $region47: #{tpu_custom_call.1} parent=1 // pred_check_branch
      %371 = sbr.rel (0) target = $region49
    $region48: #{tpu_custom_call.1} parent=1 // pred_region
      %373 = dma.done [#allocation10], 512
    $region49: #{tpu_custom_call.1} parent=1 // pred_fallthru
      _
    %374 = vsyncpa [#allocation3], 1
    %375 = vsyncpa [#allocation6], 1
    %376 = vsyncpa [#allocation4], 1
    %377 = vsyncpa [#allocation10], 1

</llo_original>
